<compile_context>
chip_gen: v5e
topology: v5e:2x2
jax: 0.10.0
libtpu: 0.0.40
codegen_flags: <defaults>
</compile_context>

<pallas_src>
import functools

import jax
import jax.numpy as jnp
from jax.experimental import pallas as pl
from jax.experimental.pallas import tpu as pltpu


# ----------------------------------------------------------------------------
# GradientReversalLayer: identity forward, (-scale * grad) backward.
# ----------------------------------------------------------------------------
@functools.partial(jax.custom_vjp, nondiff_argnums=(1,))
def gradient_reversal(x, scale=1.0):
    return x


def _grl_fwd(x, scale):
    return x, None


def _grl_bwd(scale, _, g):
    return (-scale * g,)


gradient_reversal.defvjp(_grl_fwd, _grl_bwd)


# ----------------------------------------------------------------------------
# Fused dilated-conv stack kernel (one batch element per grid step).
# ----------------------------------------------------------------------------
def _fused_kernel(*refs, n_layers, K, dilations, apply_acts, in_chs, out_chs,
                  T, off, max_pad, c_scr, slope):
    """refs = (x, w_0, b_0, ..., w_{L-1}, b_{L-1}, out, xpad_scratch, col_scratch)

      x:     (1, T, C_in0)              input activation (NTC layout), f32
      w_l:   (K * C_in_l, C_out_l)      taps flattened along the contraction dim, bf16
      b_l:   (1, C_out_l)               f32
      out:   (1, T, C_out_pad)          lane-dense bf16 output (C_out padded to 128)
      xpad:  (off + T + max_pad, c_scr) f32 padded staging slab (halo rows kept zero)
      col:   (T, K * c_scr)             bf16 im2col slab (one lane band per tap)
    """
    x_ref = refs[0]
    w_refs = [refs[1 + 2 * l] for l in range(n_layers)]
    b_refs = [refs[2 + 2 * l] for l in range(n_layers)]
    o_ref = refs[1 + 2 * n_layers]
    xpad_ref = refs[2 + 2 * n_layers]
    col_ref = refs[3 + 2 * n_layers]

    # Zero ONLY the halo rows; body rows [off, off+T) are fully overwritten over the
    # columns [:c_in] that each layer reads, before every read.  Done every grid step
    # (off+max_pad rows ~ a couple of vregs) instead of the whole-slab memset.
    xpad_ref[0:off, :] = jnp.zeros((off, c_scr), jnp.float32)
    if max_pad > 0:
        xpad_ref[off + T:off + T + max_pad, :] = jnp.zeros((max_pad, c_scr), jnp.float32)

    a = x_ref[0]                                             # (T, C_in0), f32
    for l in range(n_layers):
        c_in, c_out, d = in_chs[l], out_chs[l], dilations[l]
        pad = (K - 1) // 2 * d
        kc = K * c_in
        # Stage the current activation at the sublane-aligned offset inside the slab
        # (needed only for the shifted, halo-touching taps).
        xpad_ref[off:off + T, :c_in] = a
        # im2col: K shifted (T, c_in) windows -> K bf16 lane bands (column offset k*c_in).
        for k in range(K):
            start = off - pad + k * d
            if start == off:
                band = a.astype(jnp.bfloat16)                # centre tap: no slab read-back
            else:
                band = xpad_ref[start:start + T, :c_in].astype(jnp.bfloat16)
            col_ref[0:T, k * c_in:(k + 1) * c_in] = band
        # Single MXU matmul per layer: bf16 operands, contraction K*c_in, f32 accumulation.
        acc = jnp.dot(col_ref[0:T, 0:kc], w_refs[l][...],
                      preferred_element_type=jnp.float32)
        acc = acc + b_refs[l][...]                           # f32 bias broadcast over T
        if apply_acts[l]:
            acc = jnp.where(acc >= 0, acc, slope * acc)      # LeakyReLU(0.2) in f32
        a = acc                                              # stays on-chip between layers
    o_ref[0] = a.astype(o_ref.dtype)                         # lane-dense bf16 store


def fused_conv_stack(x, flat_params, dilations, apply_acts, in_chs, out_chs,
                     K, out_dim, slope=0.2):
    """x: (B, T, C_in0) f32. Returns (B, T, out_dim) in x.dtype."""
    B, T, C0 = x.shape
    n_layers = len(dilations)
    max_pad = max((K - 1) // 2 * d for d in dilations)
    off = ((max_pad + 7) // 8) * 8          # sublane-aligned staging offset (>= max_pad)
    c_scr = max(in_chs)                     # widest staged activation
    c_out_pad = out_chs[-1]                 # lane-dense final channel count (multiple of 128)

    kernel = functools.partial(
        _fused_kernel, n_layers=n_layers, K=K, dilations=tuple(dilations),
        apply_acts=tuple(apply_acts), in_chs=tuple(in_chs), out_chs=tuple(out_chs),
        T=T, off=off, max_pad=max_pad, c_scr=c_scr, slope=slope)

    in_specs = [pl.BlockSpec((1, T, C0), lambda i: (i, 0, 0))]
    flat_args = [x]
    for w2, b2 in flat_params:
        # Constant index_maps: weights/biases stay VMEM-resident across all grid steps.
        in_specs.append(pl.BlockSpec(w2.shape, lambda i: (0, 0)))
        in_specs.append(pl.BlockSpec(b2.shape, lambda i: (0, 0)))
        flat_args += [w2, b2]

    flops = 2 * B * T * sum(int(w2.shape[0]) * int(w2.shape[1]) for w2, _ in flat_params)
    bytes_accessed = int(
        x.size * x.dtype.itemsize
        + sum(w2.size * w2.dtype.itemsize + b2.size * b2.dtype.itemsize
              for w2, b2 in flat_params)
        + B * T * c_out_pad * 2)

    out = pl.pallas_call(
        kernel,
        out_shape=jax.ShapeDtypeStruct((B, T, c_out_pad), jnp.bfloat16),
        grid_spec=pltpu.PrefetchScalarGridSpec(
            num_scalar_prefetch=0,
            grid=(B,),
            in_specs=in_specs,
            out_specs=pl.BlockSpec((1, T, c_out_pad), lambda i: (i, 0, 0)),
            scratch_shapes=[
                pltpu.VMEM((off + T + max_pad, c_scr), jnp.float32),   # padded staging slab
                pltpu.VMEM((T, K * c_scr), jnp.bfloat16),              # im2col slab
            ],
        ),
        compiler_params=pltpu.CompilerParams(
            dimension_semantics=("parallel",),
            vmem_limit_bytes=32 * 1024 * 1024),
        cost_estimate=pl.CostEstimate(
            flops=flops, transcendentals=0, bytes_accessed=bytes_accessed),
    )(*flat_args)
    # Slice away the channel padding and restore the module's output dtype (f32).
    return out[..., :out_dim].astype(x.dtype)


# ----------------------------------------------------------------------------
# Module port.
# ----------------------------------------------------------------------------
class SpeakerAdversarialNetwork:
    """Deterministically-initialized JAX/Pallas port of the PyTorch module."""

    def __init__(self, conf, spkr_size, key):
        self.conf = conf
        self.spkr_size = spkr_size
        in_channels = sum(conf["emb_dim"][: conf["n_vq_stacks"]])
        K = conf["spkradv_kernel_size"]
        layers = conf["n_spkradv_layers"]
        conv_channels = 64
        dilation_factor = 1

        # params: list of (weight (K, C_in, C_out), bias (C_out,), dilation, apply_act)
        self.params = []
        keys = jax.random.split(key, layers)
        conv_in = in_channels
        for i in range(layers - 1):
            if i == 0:
                dilation = 1
            else:
                dilation = i if dilation_factor == 1 else dilation_factor ** i
                conv_in = conv_channels
            wk, bk = jax.random.split(keys[i])
            w = 0.05 * jax.random.normal(wk, (K, conv_in, conv_channels), jnp.float32)
            b = 0.05 * jax.random.normal(bk, (conv_channels,), jnp.float32)
            self.params.append((w, b, dilation, True))
        # final conv: conv_in -> spkr_size, dilation 1, no activation
        wk, bk = jax.random.split(keys[-1])
        w = 0.05 * jax.random.normal(wk, (K, conv_in, self.spkr_size), jnp.float32)
        b = 0.05 * jax.random.normal(bk, (self.spkr_size,), jnp.float32)
        self.params.append((w, b, 1, False))

        # Pre-flatten weights for the fused kernel: (K, C_in, C_out) -> (K*C_in, C_out),
        # cast to bf16 (MXU operands); the final layer's C_out is zero-padded to a multiple
        # of 128 so the kernel's only HBM store is lane-dense.  Biases stay f32 (added on
        # the f32 accumulator).
        self.K = K
        self.dilations = tuple(p[2] for p in self.params)
        self.apply_acts = tuple(p[3] for p in self.params)
        self.in_chs = tuple(p[0].shape[1] for p in self.params)
        c_fin = self.params[-1][0].shape[2]
        c_fin_pad = ((c_fin + 127) // 128) * 128
        self.out_chs = tuple([p[0].shape[2] for p in self.params[:-1]] + [c_fin_pad])
        self.flat_params = []
        for li, (w, b, _, _) in enumerate(self.params):
            cin, cout = w.shape[1], w.shape[2]
            w2 = w.reshape(K * cin, cout)
            b2 = b.reshape(1, cout)
            if li == len(self.params) - 1 and c_fin_pad != cout:
                w2 = jnp.pad(w2, ((0, 0), (0, c_fin_pad - cout)))
                b2 = jnp.pad(b2, ((0, 0), (0, c_fin_pad - cout)))
            self.flat_params.append((w2.astype(jnp.bfloat16), b2))

    def __call__(self, x_list):
        x = jnp.concatenate(x_list, axis=-1)                       # torch.cat(x, axis=-1)
        x = gradient_reversal(x, self.conf["spkradv_lambda"])      # identity forward
        # transpose(1,2) -> Conv1d stack (NCT) -> transpose(1,2) == NTC stack; the
        # whole stack runs in one fused Pallas kernel.
        return fused_conv_stack(
            x, self.flat_params, self.dilations, self.apply_acts,
            self.in_chs, self.out_chs, self.K, self.spkr_size)


# ----------------------------------------------------------------------------
# Pure-JAX f32 reference (PyTorch Conv1d semantics) for correctness checking.
# ----------------------------------------------------------------------------
def _reference(x_list, params):
    x = jnp.concatenate(x_list, axis=-1)
    for w, b, dilation, apply_act in params:
        K = w.shape[0]
        pad = (K - 1) // 2 * dilation
        y = jax.lax.conv_general_dilated(
            x, w,
            window_strides=(1,),
            padding=[(pad, pad)],
            rhs_dilation=(dilation,),
            dimension_numbers=("NWC", "WIO", "NWC"),
        ) + b[None, None, :]
        if apply_act:
            y = jnp.where(y >= 0, y, 0.2 * y)
        x = y
    return x


if __name__ == "__main__":
    conf = {
        "spkradv_lambda": 1.0,
        "emb_dim": [16, 16],
        "n_vq_stacks": 2,
        "spkradv_kernel_size": 3,
        "n_spkradv_layers": 4,
    }
    spkr_size = 4
    B, T = 2, 16

    key = jax.random.PRNGKey(0)
    k_param, k_x1, k_x2 = jax.random.split(key, 3)
    net = SpeakerAdversarialNetwork(conf, spkr_size, k_param)

    # forward takes a list of tensors (one per VQ stack), concatenated on the last axis
    x_list = [
        jax.random.normal(k_x1, (B, T, conf["emb_dim"][0]), jnp.float32),
        jax.random.normal(k_x2, (B, T, conf["emb_dim"][1]), jnp.float32),
    ]

    out = net(x_list)
    out = jax.block_until_ready(out)
    assert out.shape == (B, T, spkr_size), out.shape
    assert out.dtype == jnp.float32, out.dtype

    ref = jax.block_until_ready(_reference(x_list, net.params))
    # Tolerance reflects bf16 MXU inputs (weights + im2col slab) with f32 accumulation;
    # a tap/dilation misalignment bug would produce errors ~1e-1, far above this bound.
    max_err = float(jnp.max(jnp.abs(out - ref)))
    assert jnp.allclose(out, ref, atol=5e-3, rtol=5e-3), max_err

    print("KERNEL_OK")
</pallas_src>

<mosaic_0001>
module attributes {stable_mosaic.version = 11 : i64} {
  func.func @_fused_kernel(%arg0: i32, %arg1: memref<1x16x32xf32, #tpu.memory_space<vmem>>, %arg2: memref<96x64xbf16, #tpu.memory_space<vmem>>, %arg3: memref<1x64xf32, #tpu.memory_space<vmem>>, %arg4: memref<192x64xbf16, #tpu.memory_space<vmem>>, %arg5: memref<1x64xf32, #tpu.memory_space<vmem>>, %arg6: memref<192x64xbf16, #tpu.memory_space<vmem>>, %arg7: memref<1x64xf32, #tpu.memory_space<vmem>>, %arg8: memref<192x128xbf16, #tpu.memory_space<vmem>>, %arg9: memref<1x128xf32, #tpu.memory_space<vmem>>, %arg10: memref<1x16x128xbf16, #tpu.memory_space<vmem>>, %arg11: memref<26x64xf32, #tpu.memory_space<vmem>>, %arg12: memref<16x192xbf16, #tpu.memory_space<vmem>>) attributes {dimension_semantics = [#tpu.dimension_semantics<parallel>], iteration_bounds = array<i64: 2>, scalar_prefetch = 0 : i64, scratch_operands = 2 : i64, tpu.core_type = #tpu.core_type<tc>, window_params = [{transform_indices = @transform_0, window_bounds = array<i64: 1, 16, 32>}, {pipeline_mode = #tpu.pipeline_mode<synchronous>, transform_indices = @transform_1, window_bounds = array<i64: 96, 64>}, {pipeline_mode = #tpu.pipeline_mode<synchronous>, transform_indices = @transform_2, window_bounds = array<i64: 1, 64>}, {pipeline_mode = #tpu.pipeline_mode<synchronous>, transform_indices = @transform_3, window_bounds = array<i64: 192, 64>}, {pipeline_mode = #tpu.pipeline_mode<synchronous>, transform_indices = @transform_4, window_bounds = array<i64: 1, 64>}, {pipeline_mode = #tpu.pipeline_mode<synchronous>, transform_indices = @transform_5, window_bounds = array<i64: 192, 64>}, {pipeline_mode = #tpu.pipeline_mode<synchronous>, transform_indices = @transform_6, window_bounds = array<i64: 1, 64>}, {pipeline_mode = #tpu.pipeline_mode<synchronous>, transform_indices = @transform_7, window_bounds = array<i64: 192, 128>}, {pipeline_mode = #tpu.pipeline_mode<synchronous>, transform_indices = @transform_8, window_bounds = array<i64: 1, 128>}, {transform_indices = @transform_9, window_bounds = array<i64: 1, 16, 128>}]} {
    %cst = arith.constant 0.000000e+00 : f32
    %0 = vector.broadcast %cst : f32 to vector<8x64xf32>
    %c0 = arith.constant 0 : index
    %c0_0 = arith.constant 0 : index
    %1 = vector.load %arg11[%c0, %c0_0] : memref<26x64xf32, #tpu.memory_space<vmem>>, vector<8x64xf32>
    tpu.vector_store %arg11[%c0, %c0_0], %0 {strides = array<i32>} : memref<26x64xf32, #tpu.memory_space<vmem>>, vector<8x64xf32>,
    %cst_1 = arith.constant 0.000000e+00 : f32
    %2 = vector.broadcast %cst_1 : f32 to vector<2x64xf32>
    %c24 = arith.constant 24 : index
    %c0_2 = arith.constant 0 : index
    %3 = vector.load %arg11[%c24, %c0_2] : memref<26x64xf32, #tpu.memory_space<vmem>>, vector<2x64xf32>
    tpu.vector_store %arg11[%c24, %c0_2], %2 {strides = array<i32>} : memref<26x64xf32, #tpu.memory_space<vmem>>, vector<2x64xf32>,
    %c0_3 = arith.constant 0 : index
    %c0_4 = arith.constant 0 : index
    %c0_5 = arith.constant 0 : index
    %4 = vector.load %arg1[%c0_3, %c0_4, %c0_5] : memref<1x16x32xf32, #tpu.memory_space<vmem>>, vector<1x16x32xf32>
    %5 = vector.shape_cast %4 : vector<1x16x32xf32> to vector<16x32xf32>
    %c8 = arith.constant 8 : index
    %c0_6 = arith.constant 0 : index
    %6 = vector.load %arg11[%c8, %c0_6] : memref<26x64xf32, #tpu.memory_space<vmem>>, vector<16x32xf32>
    tpu.vector_store %arg11[%c8, %c0_6], %5 {strides = array<i32>} : memref<26x64xf32, #tpu.memory_space<vmem>>, vector<16x32xf32>,
    %c7 = arith.constant 7 : index
    %c0_7 = arith.constant 0 : index
    %7 = vector.load %arg11[%c7, %c0_7] : memref<26x64xf32, #tpu.memory_space<vmem>>, vector<16x32xf32>
    %8 = arith.truncf %7 : vector<16x32xf32> to vector<16x32xbf16>
    %c0_8 = arith.constant 0 : index
    %c0_9 = arith.constant 0 : index
    %9 = vector.load %arg12[%c0_8, %c0_9] : memref<16x192xbf16, #tpu.memory_space<vmem>>, vector<16x32xbf16>
    tpu.vector_store %arg12[%c0_8, %c0_9], %8 {strides = array<i32>} : memref<16x192xbf16, #tpu.memory_space<vmem>>, vector<16x32xbf16>,
    %10 = arith.truncf %5 : vector<16x32xf32> to vector<16x32xbf16>
    %c0_10 = arith.constant 0 : index
    %c32 = arith.constant 32 : index
    %11 = vector.load %arg12[%c0_10, %c32] : memref<16x192xbf16, #tpu.memory_space<vmem>>, vector<16x32xbf16>
    tpu.vector_store %arg12[%c0_10, %c32], %10 {strides = array<i32>} : memref<16x192xbf16, #tpu.memory_space<vmem>>, vector<16x32xbf16>,
    %c9 = arith.constant 9 : index
    %c0_11 = arith.constant 0 : index
    %12 = vector.load %arg11[%c9, %c0_11] : memref<26x64xf32, #tpu.memory_space<vmem>>, vector<16x32xf32>
    %13 = arith.truncf %12 : vector<16x32xf32> to vector<16x32xbf16>
    %c0_12 = arith.constant 0 : index
    %c64 = arith.constant 64 : index
    %14 = vector.load %arg12[%c0_12, %c64] : memref<16x192xbf16, #tpu.memory_space<vmem>>, vector<16x32xbf16>
    tpu.vector_store %arg12[%c0_12, %c64], %13 {strides = array<i32>} : memref<16x192xbf16, #tpu.memory_space<vmem>>, vector<16x32xbf16>,
    %c0_13 = arith.constant 0 : index
    %c0_14 = arith.constant 0 : index
    %15 = vector.load %arg12[%c0_13, %c0_14] : memref<16x192xbf16, #tpu.memory_space<vmem>>, vector<16x96xbf16>
    %c0_15 = arith.constant 0 : index
    %c0_16 = arith.constant 0 : index
    %16 = vector.load %arg2[%c0_15, %c0_16] : memref<96x64xbf16, #tpu.memory_space<vmem>>, vector<96x64xbf16>
    %cst_17 = arith.constant dense<0.000000e+00> : vector<16x64xf32>
    %17 = tpu.matmul %15, %16, %cst_17 {dimension_numbers = #tpu.dot_dimension_numbers<[1], [0], [0], [1], [0, 0, 1, 1], [], []>} : vector<16x96xbf16>, vector<96x64xbf16>, vector<16x64xf32> -> vector<16x64xf32>
    %c0_18 = arith.constant 0 : index
    %c0_19 = arith.constant 0 : index
    %18 = vector.load %arg3[%c0_18, %c0_19] : memref<1x64xf32, #tpu.memory_space<vmem>>, vector<1x64xf32>
    %19 = vector.broadcast %18 : vector<1x64xf32> to vector<16x64xf32>
    %20 = arith.addf %17, %19 : vector<16x64xf32>
    %cst_20 = arith.constant 0.000000e+00 : f32
    %21 = vector.broadcast %cst_20 : f32 to vector<16x64xf32>
    %22 = arith.cmpf oge, %20, %21 : vector<16x64xf32>
    %cst_21 = arith.constant 2.000000e-01 : f32
    %23 = vector.broadcast %cst_21 : f32 to vector<16x64xf32>
    %24 = arith.mulf %23, %20 : vector<16x64xf32>
    %25 = arith.select %22, %20, %24 : vector<16x64xi1>, vector<16x64xf32>
    %c8_22 = arith.constant 8 : index
    %c0_23 = arith.constant 0 : index
    %26 = vector.load %arg11[%c8_22, %c0_23] : memref<26x64xf32, #tpu.memory_space<vmem>>, vector<16x64xf32>
    tpu.vector_store %arg11[%c8_22, %c0_23], %25 {strides = array<i32>} : memref<26x64xf32, #tpu.memory_space<vmem>>, vector<16x64xf32>,
    %c7_24 = arith.constant 7 : index
    %c0_25 = arith.constant 0 : index
    %27 = vector.load %arg11[%c7_24, %c0_25] : memref<26x64xf32, #tpu.memory_space<vmem>>, vector<16x64xf32>
    %28 = arith.truncf %27 : vector<16x64xf32> to vector<16x64xbf16>
    %c0_26 = arith.constant 0 : index
    %c0_27 = arith.constant 0 : index
    %29 = vector.load %arg12[%c0_26, %c0_27] : memref<16x192xbf16, #tpu.memory_space<vmem>>, vector<16x64xbf16>
    tpu.vector_store %arg12[%c0_26, %c0_27], %28 {strides = array<i32>} : memref<16x192xbf16, #tpu.memory_space<vmem>>, vector<16x64xbf16>,
    %30 = arith.truncf %25 : vector<16x64xf32> to vector<16x64xbf16>
    %c0_28 = arith.constant 0 : index
    %c64_29 = arith.constant 64 : index
    %31 = vector.load %arg12[%c0_28, %c64_29] : memref<16x192xbf16, #tpu.memory_space<vmem>>, vector<16x64xbf16>
    tpu.vector_store %arg12[%c0_28, %c64_29], %30 {strides = array<i32>} : memref<16x192xbf16, #tpu.memory_space<vmem>>, vector<16x64xbf16>,
    %c9_30 = arith.constant 9 : index
    %c0_31 = arith.constant 0 : index
    %32 = vector.load %arg11[%c9_30, %c0_31] : memref<26x64xf32, #tpu.memory_space<vmem>>, vector<16x64xf32>
    %33 = arith.truncf %32 : vector<16x64xf32> to vector<16x64xbf16>
    %c0_32 = arith.constant 0 : index
    %c128 = arith.constant 128 : index
    %34 = vector.load %arg12[%c0_32, %c128] : memref<16x192xbf16, #tpu.memory_space<vmem>>, vector<16x64xbf16>
    tpu.vector_store %arg12[%c0_32, %c128], %33 {strides = array<i32>} : memref<16x192xbf16, #tpu.memory_space<vmem>>, vector<16x64xbf16>,
    %c0_33 = arith.constant 0 : index
    %c0_34 = arith.constant 0 : index
    %35 = vector.load %arg12[%c0_33, %c0_34] : memref<16x192xbf16, #tpu.memory_space<vmem>>, vector<16x192xbf16>
    %c0_35 = arith.constant 0 : index
    %c0_36 = arith.constant 0 : index
    %36 = vector.load %arg4[%c0_35, %c0_36] : memref<192x64xbf16, #tpu.memory_space<vmem>>, vector<192x64xbf16>
    %cst_37 = arith.constant dense<0.000000e+00> : vector<16x64xf32>
    %37 = tpu.matmul %35, %36, %cst_37 {dimension_numbers = #tpu.dot_dimension_numbers<[1], [0], [0], [1], [0, 0, 1, 1], [], []>} : vector<16x192xbf16>, vector<192x64xbf16>, vector<16x64xf32> -> vector<16x64xf32>
    %c0_38 = arith.constant 0 : index
    %c0_39 = arith.constant 0 : index
    %38 = vector.load %arg5[%c0_38, %c0_39] : memref<1x64xf32, #tpu.memory_space<vmem>>, vector<1x64xf32>
    %39 = vector.broadcast %38 : vector<1x64xf32> to vector<16x64xf32>
    %40 = arith.addf %37, %39 : vector<16x64xf32>
    %cst_40 = arith.constant 0.000000e+00 : f32
    %41 = vector.broadcast %cst_40 : f32 to vector<16x64xf32>
    %42 = arith.cmpf oge, %40, %41 : vector<16x64xf32>
    %cst_41 = arith.constant 2.000000e-01 : f32
    %43 = vector.broadcast %cst_41 : f32 to vector<16x64xf32>
    %44 = arith.mulf %43, %40 : vector<16x64xf32>
    %45 = arith.select %42, %40, %44 : vector<16x64xi1>, vector<16x64xf32>
    %c8_42 = arith.constant 8 : index
    %c0_43 = arith.constant 0 : index
    %46 = vector.load %arg11[%c8_42, %c0_43] : memref<26x64xf32, #tpu.memory_space<vmem>>, vector<16x64xf32>
    tpu.vector_store %arg11[%c8_42, %c0_43], %45 {strides = array<i32>} : memref<26x64xf32, #tpu.memory_space<vmem>>, vector<16x64xf32>,
    %c6 = arith.constant 6 : index
    %c0_44 = arith.constant 0 : index
    %47 = vector.load %arg11[%c6, %c0_44] : memref<26x64xf32, #tpu.memory_space<vmem>>, vector<16x64xf32>
    %48 = arith.truncf %47 : vector<16x64xf32> to vector<16x64xbf16>
    %c0_45 = arith.constant 0 : index
    %c0_46 = arith.constant 0 : index
    %49 = vector.load %arg12[%c0_45, %c0_46] : memref<16x192xbf16, #tpu.memory_space<vmem>>, vector<16x64xbf16>
    tpu.vector_store %arg12[%c0_45, %c0_46], %48 {strides = array<i32>} : memref<16x192xbf16, #tpu.memory_space<vmem>>, vector<16x64xbf16>,
    %50 = arith.truncf %45 : vector<16x64xf32> to vector<16x64xbf16>
    %c0_47 = arith.constant 0 : index
    %c64_48 = arith.constant 64 : index
    %51 = vector.load %arg12[%c0_47, %c64_48] : memref<16x192xbf16, #tpu.memory_space<vmem>>, vector<16x64xbf16>
    tpu.vector_store %arg12[%c0_47, %c64_48], %50 {strides = array<i32>} : memref<16x192xbf16, #tpu.memory_space<vmem>>, vector<16x64xbf16>,
    %c10 = arith.constant 10 : index
    %c0_49 = arith.constant 0 : index
    %52 = vector.load %arg11[%c10, %c0_49] : memref<26x64xf32, #tpu.memory_space<vmem>>, vector<16x64xf32>
    %53 = arith.truncf %52 : vector<16x64xf32> to vector<16x64xbf16>
    %c0_50 = arith.constant 0 : index
    %c128_51 = arith.constant 128 : index
    %54 = vector.load %arg12[%c0_50, %c128_51] : memref<16x192xbf16, #tpu.memory_space<vmem>>, vector<16x64xbf16>
    tpu.vector_store %arg12[%c0_50, %c128_51], %53 {strides = array<i32>} : memref<16x192xbf16, #tpu.memory_space<vmem>>, vector<16x64xbf16>,
    %c0_52 = arith.constant 0 : index
    %c0_53 = arith.constant 0 : index
    %55 = vector.load %arg12[%c0_52, %c0_53] : memref<16x192xbf16, #tpu.memory_space<vmem>>, vector<16x192xbf16>
    %c0_54 = arith.constant 0 : index
    %c0_55 = arith.constant 0 : index
    %56 = vector.load %arg6[%c0_54, %c0_55] : memref<192x64xbf16, #tpu.memory_space<vmem>>, vector<192x64xbf16>
    %cst_56 = arith.constant dense<0.000000e+00> : vector<16x64xf32>
    %57 = tpu.matmul %55, %56, %cst_56 {dimension_numbers = #tpu.dot_dimension_numbers<[1], [0], [0], [1], [0, 0, 1, 1], [], []>} : vector<16x192xbf16>, vector<192x64xbf16>, vector<16x64xf32> -> vector<16x64xf32>
    %c0_57 = arith.constant 0 : index
    %c0_58 = arith.constant 0 : index
    %58 = vector.load %arg7[%c0_57, %c0_58] : memref<1x64xf32, #tpu.memory_space<vmem>>, vector<1x64xf32>
    %59 = vector.broadcast %58 : vector<1x64xf32> to vector<16x64xf32>
    %60 = arith.addf %57, %59 : vector<16x64xf32>
    %cst_59 = arith.constant 0.000000e+00 : f32
    %61 = vector.broadcast %cst_59 : f32 to vector<16x64xf32>
    %62 = arith.cmpf oge, %60, %61 : vector<16x64xf32>
    %cst_60 = arith.constant 2.000000e-01 : f32
    %63 = vector.broadcast %cst_60 : f32 to vector<16x64xf32>
    %64 = arith.mulf %63, %60 : vector<16x64xf32>
    %65 = arith.select %62, %60, %64 : vector<16x64xi1>, vector<16x64xf32>
    %c8_61 = arith.constant 8 : index
    %c0_62 = arith.constant 0 : index
    %66 = vector.load %arg11[%c8_61, %c0_62] : memref<26x64xf32, #tpu.memory_space<vmem>>, vector<16x64xf32>
    tpu.vector_store %arg11[%c8_61, %c0_62], %65 {strides = array<i32>} : memref<26x64xf32, #tpu.memory_space<vmem>>, vector<16x64xf32>,
    %c7_63 = arith.constant 7 : index
    %c0_64 = arith.constant 0 : index
    %67 = vector.load %arg11[%c7_63, %c0_64] : memref<26x64xf32, #tpu.memory_space<vmem>>, vector<16x64xf32>
    %68 = arith.truncf %67 : vector<16x64xf32> to vector<16x64xbf16>
    %c0_65 = arith.constant 0 : index
    %c0_66 = arith.constant 0 : index
    %69 = vector.load %arg12[%c0_65, %c0_66] : memref<16x192xbf16, #tpu.memory_space<vmem>>, vector<16x64xbf16>
    tpu.vector_store %arg12[%c0_65, %c0_66], %68 {strides = array<i32>} : memref<16x192xbf16, #tpu.memory_space<vmem>>, vector<16x64xbf16>,
    %70 = arith.truncf %65 : vector<16x64xf32> to vector<16x64xbf16>
    %c0_67 = arith.constant 0 : index
    %c64_68 = arith.constant 64 : index
    %71 = vector.load %arg12[%c0_67, %c64_68] : memref<16x192xbf16, #tpu.memory_space<vmem>>, vector<16x64xbf16>
    tpu.vector_store %arg12[%c0_67, %c64_68], %70 {strides = array<i32>} : memref<16x192xbf16, #tpu.memory_space<vmem>>, vector<16x64xbf16>,
    %c9_69 = arith.constant 9 : index
    %c0_70 = arith.constant 0 : index
    %72 = vector.load %arg11[%c9_69, %c0_70] : memref<26x64xf32, #tpu.memory_space<vmem>>, vector<16x64xf32>
    %73 = arith.truncf %72 : vector<16x64xf32> to vector<16x64xbf16>
    %c0_71 = arith.constant 0 : index
    %c128_72 = arith.constant 128 : index
    %74 = vector.load %arg12[%c0_71, %c128_72] : memref<16x192xbf16, #tpu.memory_space<vmem>>, vector<16x64xbf16>
    tpu.vector_store %arg12[%c0_71, %c128_72], %73 {strides = array<i32>} : memref<16x192xbf16, #tpu.memory_space<vmem>>, vector<16x64xbf16>,
    %c0_73 = arith.constant 0 : index
    %c0_74 = arith.constant 0 : index
    %75 = vector.load %arg12[%c0_73, %c0_74] : memref<16x192xbf16, #tpu.memory_space<vmem>>, vector<16x192xbf16>
    %c0_75 = arith.constant 0 : index
    %c0_76 = arith.constant 0 : index
    %76 = vector.load %arg8[%c0_75, %c0_76] : memref<192x128xbf16, #tpu.memory_space<vmem>>, vector<192x128xbf16>
    %cst_77 = arith.constant dense<0.000000e+00> : vector<16x128xf32>
    %77 = tpu.matmul %75, %76, %cst_77 {dimension_numbers = #tpu.dot_dimension_numbers<[1], [0], [0], [1], [0, 0, 1, 1], [], []>} : vector<16x192xbf16>, vector<192x128xbf16>, vector<16x128xf32> -> vector<16x128xf32>
    %c0_78 = arith.constant 0 : index
    %c0_79 = arith.constant 0 : index
    %78 = vector.load %arg9[%c0_78, %c0_79] : memref<1x128xf32, #tpu.memory_space<vmem>>, vector<1x128xf32>
    %79 = vector.broadcast %78 : vector<1x128xf32> to vector<16x128xf32>
    %80 = arith.addf %77, %79 : vector<16x128xf32>
    %81 = arith.truncf %80 : vector<16x128xf32> to vector<16x128xbf16>
    %c0_80 = arith.constant 0 : index
    %c0_81 = arith.constant 0 : index
    %c0_82 = arith.constant 0 : index
    %82 = vector.load %arg10[%c0_80, %c0_81, %c0_82] : memref<1x16x128xbf16, #tpu.memory_space<vmem>>, vector<1x16x128xbf16>
    %83 = vector.shape_cast %82 : vector<1x16x128xbf16> to vector<16x128xbf16>
    %84 = vector.shape_cast %81 : vector<16x128xbf16> to vector<1x16x128xbf16>
    tpu.vector_store %arg10[%c0_80, %c0_81, %c0_82], %84 {strides = array<i32>} : memref<1x16x128xbf16, #tpu.memory_space<vmem>>, vector<1x16x128xbf16>,
    return
  }
  func.func @transform_0(%arg0: i32) -> (i32, i32, i32) {
    %c0_i32 = arith.constant 0 : i32
    %c0_i32_0 = arith.constant 0 : i32
    %c0_i32_1 = arith.constant 0 : i32
    return %arg0, %c0_i32, %c0_i32_0 : i32, i32, i32
  }
  func.func @transform_1(%arg0: i32) -> (i32, i32) {
    %c0_i32 = arith.constant 0 : i32
    %c0_i32_0 = arith.constant 0 : i32
    %c0_i32_1 = arith.constant 0 : i32
    return %c0_i32, %c0_i32_0 : i32, i32
  }
  func.func @transform_2(%arg0: i32) -> (i32, i32) {
    %c0_i32 = arith.constant 0 : i32
    %c0_i32_0 = arith.constant 0 : i32
    %c0_i32_1 = arith.constant 0 : i32
    return %c0_i32, %c0_i32_0 : i32, i32
  }
  func.func @transform_3(%arg0: i32) -> (i32, i32) {
    %c0_i32 = arith.constant 0 : i32
    %c0_i32_0 = arith.constant 0 : i32
    %c0_i32_1 = arith.constant 0 : i32
    return %c0_i32, %c0_i32_0 : i32, i32
  }
  func.func @transform_4(%arg0: i32) -> (i32, i32) {
    %c0_i32 = arith.constant 0 : i32
    %c0_i32_0 = arith.constant 0 : i32
    %c0_i32_1 = arith.constant 0 : i32
    return %c0_i32, %c0_i32_0 : i32, i32
  }
  func.func @transform_5(%arg0: i32) -> (i32, i32) {
    %c0_i32 = arith.constant 0 : i32
    %c0_i32_0 = arith.constant 0 : i32
    %c0_i32_1 = arith.constant 0 : i32
    return %c0_i32, %c0_i32_0 : i32, i32
  }
  func.func @transform_6(%arg0: i32) -> (i32, i32) {
    %c0_i32 = arith.constant 0 : i32
    %c0_i32_0 = arith.constant 0 : i32
    %c0_i32_1 = arith.constant 0 : i32
    return %c0_i32, %c0_i32_0 : i32, i32
  }
  func.func @transform_7(%arg0: i32) -> (i32, i32) {
    %c0_i32 = arith.constant 0 : i32
    %c0_i32_0 = arith.constant 0 : i32
    %c0_i32_1 = arith.constant 0 : i32
    return %c0_i32, %c0_i32_0 : i32, i32
  }
  func.func @transform_8(%arg0: i32) -> (i32, i32) {
    %c0_i32 = arith.constant 0 : i32
    %c0_i32_0 = arith.constant 0 : i32
    %c0_i32_1 = arith.constant 0 : i32
    return %c0_i32, %c0_i32_0 : i32, i32
  }
  func.func @transform_9(%arg0: i32) -> (i32, i32, i32) {
    %c0_i32 = arith.constant 0 : i32
    %c0_i32_0 = arith.constant 0 : i32
    %c0_i32_1 = arith.constant 0 : i32
    return %arg0, %c0_i32, %c0_i32_0 : i32, i32, i32
  }
}

</mosaic_0001>

<llo_original>
// kernel: tpu_custom_call.1
$region0: #{tpu_custom_call.1}
  #allocation0 [shape = 'u32[]', space=smem, size = 0x4, offset = 0x4, fixed_abs, tag = 'smem constant byte address 0x4 - core index']
  #allocation1 [shape = 'u32[72,128]{1,0:T(1,128)}', space=vmem, size = 0x9000, scoped, tag = 'internal scratch']
  #allocation2 [shape = 'f32[26,64]{1,0:T(8,128)}', space=vmem, size = 0x4000, scoped, tag = 'scratch operand']
  #allocation3 [shape = 'bf16[16,192]{1,0:T(8,128)(2,1)}', space=vmem, size = 0x2000, scoped, tag = 'scratch operand']
  %s0 = inlined_call_operand.vmem [shape: f32[2,16,32], index: 0, kind: input, shape index: {}]
  %s1 = inlined_call_operand.vmem [shape: bf16[96,64], index: 1, kind: input, shape index: {}]
  %s2 = inlined_call_operand.vmem [shape: f32[1,64], index: 2, kind: input, shape index: {}]
  %s3 = inlined_call_operand.vmem [shape: bf16[192,64], index: 3, kind: input, shape index: {}]
  %s4 = inlined_call_operand.vmem [shape: f32[1,64], index: 4, kind: input, shape index: {}]
  %s5 = inlined_call_operand.vmem [shape: bf16[192,64], index: 5, kind: input, shape index: {}]
  %s6 = inlined_call_operand.vmem [shape: f32[1,64], index: 6, kind: input, shape index: {}]
  %s7 = inlined_call_operand.vmem [shape: bf16[192,128], index: 7, kind: input, shape index: {}]
  %s8 = inlined_call_operand.vmem [shape: f32[1,128], index: 8, kind: input, shape index: {}]
  %s9 = inlined_call_operand.hbm [shape: bf16[2,16,128], index: 9, kind: output, shape index: {}]
  %s10 = sld [smem:[#allocation0]]
  $region69: #{tpu_custom_call.1} parent=0
    _
  %s12 = ssub.s32 1, %s10
  %s13 = scalar_select 0, %s12, %s10
  $region1: #{tpu_custom_call.1} parent=0
    #allocation4 [shape = 'u8[8192]{0}', space=vmem, size = 0x2000, scoped, tag = 'output window, operand 0']
    #allocation5 [shape = 's32[2]{0}', space=sflag, size = 0x8, scoped, tag = 'scoped memory for tpu_custom_call.1']
    %14 = vsyncpa [#allocation5], 0
    %s15 = scalar_lea.sflag [#allocation5], 1
    %16 = vsyncpa %s15, 0
    loop: start=0, step=1, limit=4
    $region2: #{tpu_custom_call.1} parent=1 // loop_pre_header
      _
    $region3: #{tpu_custom_call.1} parent=1 // loop_header
      %s18 = sphi 0, %s22
      %p19 = scmp.ge.s32.totalorder %s18, 4
      %s28 = sphi 0, %s30
      %s31 = sphi 0, %s28
      %s32 = sphi 0, %s31
      %s48 = sphi 0, %s32
      %s52 = sphi 0, %s52
      %s54 = sphi 0, %s52
      %s55 = sphi 0, %s54
      %s69 = sphi 0, %s55
      %s73 = sphi 0, %s73
      %s75 = sphi 0, %s73
      %s76 = sphi 0, %s75
      %s90 = sphi 0, %s76
      %s94 = sphi 0, %s94
      %s96 = sphi 0, %s94
      %s97 = sphi 0, %s96
      %s111 = sphi 0, %s97
      %s115 = sphi 0, %s115
      %s117 = sphi 0, %s115
      %s118 = sphi 0, %s117
      %s132 = sphi 0, %s118
      %s136 = sphi 0, %s136
      %s138 = sphi 0, %s136
      %s139 = sphi 0, %s138
      %s153 = sphi 0, %s139
      %s157 = sphi 0, %s157
      %s159 = sphi 0, %s157
      %s160 = sphi 0, %s159
      %s174 = sphi 0, %s160
      %s178 = sphi 0, %s178
      %s180 = sphi 0, %s178
      %s181 = sphi 0, %s180
      %s195 = sphi 0, %s181
      %s199 = sphi 0, %s199
      %s201 = sphi 0, %s199
      %s202 = sphi 0, %s201
      %s216 = sphi 0, %s202
      %s222 = sphi 0, %s224
      %s225 = sphi 0, %s222
      %s226 = sphi 0, %s225
      %s242 = sphi 0, %s226
    $region4: #{tpu_custom_call.1} parent=1 // loop_header_branch
      %21 = sbr.rel (%p19) target = $region8
    $region5: #{tpu_custom_call.1} parent=1 // loop_body
      %s23 = ssub.s32 %s18, 1
      %s24 = ssub.s32 %s18, 2
      %s25 = sadd.s32 %s18, 1
      %s26 = ssub.s32 %s18, %s25
      %p27 = scmp.eq.s32.totalorder %s26, 0
      %s29 = sadd.s32 %s28, 1
      %s30 = scalar_select %p27, %s28, %s29
      %p33 = pneg %p27
      %p34 = scmp.eq.s32.totalorder %s18, 1
      %p35 = por %p33, %p34
      %p36 = scmp.ne.s32.totalorder %s28, %s31
      %p37 = scmp.eq.s32.totalorder %s18, 0
      %p38 = por %p36, %p37
      %p39 = scmp.ne.s32.totalorder %s28, %s31
      %p40 = scmp.eq.s32.totalorder %s23, 1
      %p41 = por %p39, %p40
      %p42 = scmp.ne.s32.totalorder %s31, %s32
      %p43 = scmp.eq.s32.totalorder %s23, 0
      %p44 = por %p42, %p43
      %p45 = scmp.ne.s32.totalorder %s31, %s32
      %p46 = scmp.eq.s32.totalorder %s24, 1
      %p47 = por %p45, %p46
      %p49 = scmp.ne.s32.totalorder %s32, %s48
      %p50 = scmp.eq.s32.totalorder %s24, 0
      %p51 = por %p49, %p50
      %s53 = sadd.s32 %s52, 1
      %p56 = scmp.eq.s32.totalorder %s18, 1
      %p57 = scmp.ne.s32.totalorder %s52, %s54
      %p58 = scmp.eq.s32.totalorder %s18, 0
      %p59 = por %p57, %p58
      %p60 = scmp.ne.s32.totalorder %s52, %s54
      %p61 = scmp.eq.s32.totalorder %s23, 1
      %p62 = por %p60, %p61
      %p63 = scmp.ne.s32.totalorder %s54, %s55
      %p64 = scmp.eq.s32.totalorder %s23, 0
      %p65 = por %p63, %p64
      %p66 = scmp.ne.s32.totalorder %s54, %s55
      %p67 = scmp.eq.s32.totalorder %s24, 1
      %p68 = por %p66, %p67
      %p70 = scmp.ne.s32.totalorder %s55, %s69
      %p71 = scmp.eq.s32.totalorder %s24, 0
      %p72 = por %p70, %p71
      %s74 = sadd.s32 %s73, 1
      %p77 = scmp.eq.s32.totalorder %s18, 1
      %p78 = scmp.ne.s32.totalorder %s73, %s75
      %p79 = scmp.eq.s32.totalorder %s18, 0
      %p80 = por %p78, %p79
      %p81 = scmp.ne.s32.totalorder %s73, %s75
      %p82 = scmp.eq.s32.totalorder %s23, 1
      %p83 = por %p81, %p82
      %p84 = scmp.ne.s32.totalorder %s75, %s76
      %p85 = scmp.eq.s32.totalorder %s23, 0
      %p86 = por %p84, %p85
      %p87 = scmp.ne.s32.totalorder %s75, %s76
      %p88 = scmp.eq.s32.totalorder %s24, 1
      %p89 = por %p87, %p88
      %p91 = scmp.ne.s32.totalorder %s76, %s90
      %p92 = scmp.eq.s32.totalorder %s24, 0
      %p93 = por %p91, %p92
      %s95 = sadd.s32 %s94, 1
      %p98 = scmp.eq.s32.totalorder %s18, 1
      %p99 = scmp.ne.s32.totalorder %s94, %s96
      %p100 = scmp.eq.s32.totalorder %s18, 0
      %p101 = por %p99, %p100
      %p102 = scmp.ne.s32.totalorder %s94, %s96
      %p103 = scmp.eq.s32.totalorder %s23, 1
      %p104 = por %p102, %p103
      %p105 = scmp.ne.s32.totalorder %s96, %s97
      %p106 = scmp.eq.s32.totalorder %s23, 0
      %p107 = por %p105, %p106
      %p108 = scmp.ne.s32.totalorder %s96, %s97
      %p109 = scmp.eq.s32.totalorder %s24, 1
      %p110 = por %p108, %p109
      %p112 = scmp.ne.s32.totalorder %s97, %s111
      %p113 = scmp.eq.s32.totalorder %s24, 0
      %p114 = por %p112, %p113
      %s116 = sadd.s32 %s115, 1
      %p119 = scmp.eq.s32.totalorder %s18, 1
      %p120 = scmp.ne.s32.totalorder %s115, %s117
      %p121 = scmp.eq.s32.totalorder %s18, 0
      %p122 = por %p120, %p121
      %p123 = scmp.ne.s32.totalorder %s115, %s117
      %p124 = scmp.eq.s32.totalorder %s23, 1
      %p125 = por %p123, %p124
      %p126 = scmp.ne.s32.totalorder %s117, %s118
      %p127 = scmp.eq.s32.totalorder %s23, 0
      %p128 = por %p126, %p127
      %p129 = scmp.ne.s32.totalorder %s117, %s118
      %p130 = scmp.eq.s32.totalorder %s24, 1
      %p131 = por %p129, %p130
      %p133 = scmp.ne.s32.totalorder %s118, %s132
      %p134 = scmp.eq.s32.totalorder %s24, 0
      %p135 = por %p133, %p134
      %s137 = sadd.s32 %s136, 1
      %p140 = scmp.eq.s32.totalorder %s18, 1
      %p141 = scmp.ne.s32.totalorder %s136, %s138
      %p142 = scmp.eq.s32.totalorder %s18, 0
      %p143 = por %p141, %p142
      %p144 = scmp.ne.s32.totalorder %s136, %s138
      %p145 = scmp.eq.s32.totalorder %s23, 1
      %p146 = por %p144, %p145
      %p147 = scmp.ne.s32.totalorder %s138, %s139
      %p148 = scmp.eq.s32.totalorder %s23, 0
      %p149 = por %p147, %p148
      %p150 = scmp.ne.s32.totalorder %s138, %s139
      %p151 = scmp.eq.s32.totalorder %s24, 1
      %p152 = por %p150, %p151
      %p154 = scmp.ne.s32.totalorder %s139, %s153
      %p155 = scmp.eq.s32.totalorder %s24, 0
      %p156 = por %p154, %p155
      %s158 = sadd.s32 %s157, 1
      %p161 = scmp.eq.s32.totalorder %s18, 1
      %p162 = scmp.ne.s32.totalorder %s157, %s159
      %p163 = scmp.eq.s32.totalorder %s18, 0
      %p164 = por %p162, %p163
      %p165 = scmp.ne.s32.totalorder %s157, %s159
      %p166 = scmp.eq.s32.totalorder %s23, 1
      %p167 = por %p165, %p166
      %p168 = scmp.ne.s32.totalorder %s159, %s160
      %p169 = scmp.eq.s32.totalorder %s23, 0
      %p170 = por %p168, %p169
      %p171 = scmp.ne.s32.totalorder %s159, %s160
      %p172 = scmp.eq.s32.totalorder %s24, 1
      %p173 = por %p171, %p172
      %p175 = scmp.ne.s32.totalorder %s160, %s174
      %p176 = scmp.eq.s32.totalorder %s24, 0
      %p177 = por %p175, %p176
      %s179 = sadd.s32 %s178, 1
      %p182 = scmp.eq.s32.totalorder %s18, 1
      %p183 = scmp.ne.s32.totalorder %s178, %s180
      %p184 = scmp.eq.s32.totalorder %s18, 0
      %p185 = por %p183, %p184
      %p186 = scmp.ne.s32.totalorder %s178, %s180
      %p187 = scmp.eq.s32.totalorder %s23, 1
      %p188 = por %p186, %p187
      %p189 = scmp.ne.s32.totalorder %s180, %s181
      %p190 = scmp.eq.s32.totalorder %s23, 0
      %p191 = por %p189, %p190
      %p192 = scmp.ne.s32.totalorder %s180, %s181
      %p193 = scmp.eq.s32.totalorder %s24, 1
      %p194 = por %p192, %p193
      %p196 = scmp.ne.s32.totalorder %s181, %s195
      %p197 = scmp.eq.s32.totalorder %s24, 0
      %p198 = por %p196, %p197
      %s200 = sadd.s32 %s199, 1
      %p203 = scmp.eq.s32.totalorder %s18, 1
      %p204 = scmp.ne.s32.totalorder %s199, %s201
      %p205 = scmp.eq.s32.totalorder %s18, 0
      %p206 = por %p204, %p205
      %p207 = scmp.ne.s32.totalorder %s199, %s201
      %p208 = scmp.eq.s32.totalorder %s23, 1
      %p209 = por %p207, %p208
      %p210 = scmp.ne.s32.totalorder %s201, %s202
      %p211 = scmp.eq.s32.totalorder %s23, 0
      %p212 = por %p210, %p211
      %p213 = scmp.ne.s32.totalorder %s201, %s202
      %p214 = scmp.eq.s32.totalorder %s24, 1
      %p215 = por %p213, %p214
      %p217 = scmp.ne.s32.totalorder %s202, %s216
      %p218 = scmp.eq.s32.totalorder %s24, 0
      %p219 = por %p217, %p218
      %s220 = ssub.s32 %s18, %s25
      %p221 = scmp.eq.s32.totalorder %s220, 0
      %s223 = sadd.s32 %s222, 1
      %s224 = scalar_select %p221, %s222, %s223
      %p227 = pneg %p221
      %p228 = scmp.eq.s32.totalorder %s18, 1
      %p229 = por %p227, %p228
      %p230 = scmp.ne.s32.totalorder %s222, %s225
      %p231 = scmp.eq.s32.totalorder %s18, 0
      %p232 = por %p230, %p231
      %p233 = scmp.ne.s32.totalorder %s222, %s225
      %p234 = scmp.eq.s32.totalorder %s23, 1
      %p235 = por %p233, %p234
      %p236 = scmp.ne.s32.totalorder %s225, %s226
      %p237 = scmp.eq.s32.totalorder %s23, 0
      %p238 = por %p236, %p237
      %p239 = scmp.ne.s32.totalorder %s225, %s226
      %p240 = scmp.eq.s32.totalorder %s24, 1
      %p241 = por %p239, %p240
      %p243 = scmp.ne.s32.totalorder %s226, %s242
      %p244 = scmp.eq.s32.totalorder %s24, 0
      %p245 = por %p243, %p244
      %p246 = scmp.le.s32.totalorder 1, %s18
      %p247 = scmp.lt.s32.totalorder %s18, 3
      %p248 = pnand %p246, %p247
      %p249 = pneg %p248
      // Predicated region
      $region9: #{tpu_custom_call.1} parent=5 // pred_check
        _
      $region10: #{tpu_custom_call.1} parent=5 // pred_check_branch
        %251 = sbr.rel (%p248) target = $region12
      $region11: #{tpu_custom_call.1} parent=5 // pred_region
        %s252 = ssub.s32 %s18, 1
        // Predicated region
        $region13: #{tpu_custom_call.1} parent=11 // pred_check
          %p253 = pneg %p65
        $region14: #{tpu_custom_call.1} parent=11 // pred_check_branch
          %255 = sbr.rel (%p253) target = $region16
        $region15: #{tpu_custom_call.1} parent=11 // pred_region
          _
        $region16: #{tpu_custom_call.1} parent=11 // pred_fallthru
          _
        // Predicated region
        $region17: #{tpu_custom_call.1} parent=11 // pred_check
          %p256 = pneg %p86
        $region18: #{tpu_custom_call.1} parent=11 // pred_check_branch
          %258 = sbr.rel (%p256) target = $region20
        $region19: #{tpu_custom_call.1} parent=11 // pred_region
          _
        $region20: #{tpu_custom_call.1} parent=11 // pred_fallthru
          _
        // Predicated region
        $region21: #{tpu_custom_call.1} parent=11 // pred_check
          %p259 = pneg %p107
        $region22: #{tpu_custom_call.1} parent=11 // pred_check_branch
          %261 = sbr.rel (%p259) target = $region24
        $region23: #{tpu_custom_call.1} parent=11 // pred_region
          _
        $region24: #{tpu_custom_call.1} parent=11 // pred_fallthru
          _
        // Predicated region
        $region25: #{tpu_custom_call.1} parent=11 // pred_check
          %p262 = pneg %p128
        $region26: #{tpu_custom_call.1} parent=11 // pred_check_branch
          %264 = sbr.rel (%p262) target = $region28
        $region27: #{tpu_custom_call.1} parent=11 // pred_region
          _
        $region28: #{tpu_custom_call.1} parent=11 // pred_fallthru
          _
        // Predicated region
        $region29: #{tpu_custom_call.1} parent=11 // pred_check
          %p265 = pneg %p149
        $region30: #{tpu_custom_call.1} parent=11 // pred_check_branch
          %267 = sbr.rel (%p265) target = $region32
        $region31: #{tpu_custom_call.1} parent=11 // pred_region
          _
        $region32: #{tpu_custom_call.1} parent=11 // pred_fallthru
          _
        // Predicated region
        $region33: #{tpu_custom_call.1} parent=11 // pred_check
          %p268 = pneg %p170
        $region34: #{tpu_custom_call.1} parent=11 // pred_check_branch
          %270 = sbr.rel (%p268) target = $region36
        $region35: #{tpu_custom_call.1} parent=11 // pred_region
          _
        $region36: #{tpu_custom_call.1} parent=11 // pred_fallthru
          _
        // Predicated region
        $region37: #{tpu_custom_call.1} parent=11 // pred_check
          %p271 = pneg %p191
        $region38: #{tpu_custom_call.1} parent=11 // pred_check_branch
          %273 = sbr.rel (%p271) target = $region40
        $region39: #{tpu_custom_call.1} parent=11 // pred_region
          _
        $region40: #{tpu_custom_call.1} parent=11 // pred_fallthru
          _
        // Predicated region
        $region41: #{tpu_custom_call.1} parent=11 // pred_check
          %p274 = pneg %p212
        $region42: #{tpu_custom_call.1} parent=11 // pred_check_branch
          %276 = sbr.rel (%p274) target = $region44
        $region43: #{tpu_custom_call.1} parent=11 // pred_region
          _
        $region44: #{tpu_custom_call.1} parent=11 // pred_fallthru
          _
      $region12: #{tpu_custom_call.1} parent=5 // pred_fallthru
        _
      %p277 = scmp.lt.s32.totalorder %s18, 2
      // Predicated region
      $region45: #{tpu_custom_call.1} parent=5 // pred_check
        %p278 = pneg %p277
      $region46: #{tpu_custom_call.1} parent=5 // pred_check_branch
        %280 = sbr.rel (%p278) target = $region48
      $region47: #{tpu_custom_call.1} parent=5 // pred_region
        // Predicated region
        $region49: #{tpu_custom_call.1} parent=47 // pred_check
          %p281 = pneg %p38
        $region50: #{tpu_custom_call.1} parent=47 // pred_check_branch
          %283 = sbr.rel (%p281) target = $region52
        $region51: #{tpu_custom_call.1} parent=47 // pred_region
          %p284 = scmp.lt.s32.totalorder %s18, 1
          %s285 = scalar_select %p284, %s18, 1
          %s286 = smul.addr %s285, 2
          %s287 = smul.addr %s286, 8
          %s288 = scalar_lea.vmem %s0, %s287
        $region52: #{tpu_custom_call.1} parent=47 // pred_fallthru
          _
      $region48: #{tpu_custom_call.1} parent=5 // pred_fallthru
        _
      %p289 = scmp.le.s32.totalorder 1, %s18
      %p290 = scmp.lt.s32.totalorder %s18, 3
      %p291 = pnand %p289, %p290
      %p292 = pneg %p291
      // Predicated region
      $region53: #{tpu_custom_call.1} parent=5 // pred_check
        _
      $region54: #{tpu_custom_call.1} parent=5 // pred_check_branch
        %294 = sbr.rel (%p291) target = $region56
      $region55: #{tpu_custom_call.1} parent=5 // pred_region
        %s295 = ssub.s32 %s18, 1
        %p296 = scmp.lt.s32.totalorder %s23, 1
        %s297 = scalar_select %p296, %s23, 1
        %s298 = smul.addr %s297, 2
        %s299 = smul.addr %s298, 8
        %s300 = scalar_lea.vmem %s0, %s299
        %p301 = pneg %p44
        %p302 = pneg %p41
        %p303 = pneg %p65
        %p304 = pneg %p62
        %p305 = pneg %p86
        %p306 = pneg %p83
        %p307 = pneg %p107
        %p308 = pneg %p104
        %p309 = pneg %p128
        %p310 = pneg %p125
        %p311 = pneg %p149
        %p312 = pneg %p146
        %p313 = pneg %p170
        %p314 = pneg %p167
        %p315 = pneg %p191
        %p316 = pneg %p188
        %p317 = pneg %p212
        %p318 = pneg %p209
        %p319 = pneg %p238
        %p320 = pneg %p235
        %s321 = sand.u32 %s225, 1
        %s322 = scalar_lea.sflag [#allocation5], %s321
        %s323 = sand.u32 %s225, 1
        %s324 = smul.addr %s323, 8
        %s325 = scalar_lea.vmem [#allocation4], %s324
        %p326 = scmp.lt.s32.totalorder %s23, 1
        %s327 = scalar_select %p326, %s23, 1
        %s328 = smul.addr %s327, 2
        %s329 = smul.addr %s328, 8
        %s330 = scalar_lea.vmem %s0, %s329
        %vm332 = vcmask 523264
        %333 = vst.msk [vmem:[#allocation2] sm:$0xff] %vm332, 0.0
        %vm334 = vcmask 517120
        %335 = vst.msk [vmem:[#allocation2 + $0x18] sm:$0x3] %vm334, 0.0
        %v336 = vld [vmem:[%s330] sm:$0xff]
        %v337 = vld [vmem:[%s330 + $0x8] sm:$0xff]
        %vm338 = vcmask 261120
        %339 = vst.msk [vmem:[#allocation2 + $0x8] sm:$0xff] %vm338, %v336
        %340 = vst.msk [vmem:[#allocation2 + $0x10] sm:$0xff] %vm338, %v337
        %v341 = vld [vmem:[#allocation2 + $0x7] sm:$0xff]
        %v342 = vld [vmem:[#allocation2 + $0xf] sm:$0xff]
        %v343 = vpack.c.bf16 %v341, %v341
        %v344 = vpack.c.bf16 %v342, %v342
        %vm345 = vcmask 257024
        %346 = vst.msk [vmem:[#allocation3] sm:$0xf] %vm345, %v343
        %347 = vst.msk [vmem:[#allocation3 + $0x8] sm:$0xf] %vm345, %v344
        %v348 = vpack.c.bf16 %v336, %v336
        %v349 = vpack.c.bf16 %v337, %v337
        %352 = vrot.lane.b32.xlu0 %v348, 32
        %v353 = vpop.permute.xlu0 %352
        %354 = vrot.lane.b32.xlu0 %v349, 32
        %v355 = vpop.permute.xlu0 %354
        %vm358 = vcmask 519424
        %359 = vst.msk [vmem:[#allocation3] sm:$0xf] %vm358, %v353
        %360 = vst.msk [vmem:[#allocation3 + $0x8] sm:$0xf] %vm358, %v355
        %v361 = vld [vmem:[#allocation2 + $0x9] sm:$0xff]
        %v362 = vld [vmem:[#allocation2 + $0x11] sm:$0xff]
        %v363 = vpack.c.bf16 %v361, %v361
        %v364 = vpack.c.bf16 %v362, %v362
        %367 = vrot.lane.b32.xlu0 %v363, 64
        %v368 = vpop.permute.xlu0 %367
        %369 = vrot.lane.b32.xlu0 %v364, 64
        %v370 = vpop.permute.xlu0 %369
        %vm373 = vcmask 781824
        %374 = vst.msk [vmem:[#allocation3] sm:$0xf] %vm373, %v368
        %375 = vst.msk [vmem:[#allocation3 + $0x8] sm:$0xf] %vm373, %v370
        %v376 = vld [vmem:[#allocation3] sm:$0xf]
        %v377 = vld [vmem:[#allocation3 + $0x8] sm:$0xf]
        %v378 = vld [vmem:[%s1] sm:$0xf]
        %v379 = vld [vmem:[%s1 + $0x4] sm:$0xf]
        %v380 = vld [vmem:[%s1 + $0x8] sm:$0xf]
        %v381 = vld [vmem:[%s1 + $0xc] sm:$0xf]
        %v382 = vld [vmem:[%s1 + $0x10] sm:$0xf]
        %v383 = vld [vmem:[%s1 + $0x14] sm:$0xf]
        %v384 = vld [vmem:[%s1 + $0x18] sm:$0xf]
        %v385 = vld [vmem:[%s1 + $0x1c] sm:$0xf]
        %v386 = vld [vmem:[%s1 + $0x20] sm:$0xf]
        %v387 = vld [vmem:[%s1 + $0x24] sm:$0xf]
        %v388 = vld [vmem:[%s1 + $0x28] sm:$0xf]
        %v389 = vld [vmem:[%s1 + $0x2c] sm:$0xf]
        %v390 = vld [vmem:[%s2] sm:$0x1]
        %v392 = vperm.slane %v390, 0
        %v396 = vunpack.c.l.b16 %v376
        %v397 = vunpack.c.l.b16 %v377
        %v398 = vpack.c.b16 %v397, %v396
        %v411 = vunpack.c.l.b16 %v378
        %v412 = vunpack.c.l.b16 %v379
        %v413 = vunpack.c.l.b16 %v380
        %v414 = vunpack.c.l.b16 %v381
        %v415 = vunpack.c.l.b16 %v382
        %v416 = vunpack.c.l.b16 %v383
        %v417 = vunpack.c.l.b16 %v384
        %v418 = vunpack.c.l.b16 %v385
        %v419 = vunpack.c.l.b16 %v386
        %v420 = vunpack.c.l.b16 %v387
        %v421 = vunpack.c.l.b16 %v388
        %v422 = vunpack.c.l.b16 %v389
        %v423 = vpack.c.b16 %v412, %v411
        %v424 = vpack.c.b16 %v414, %v413
        %v425 = vpack.c.b16 %v416, %v415
        %v426 = vpack.c.b16 %v418, %v417
        %v427 = vpack.c.b16 %v420, %v419
        %v428 = vpack.c.b16 %v422, %v421
        %vm435 = vcmask 785408
        %v437 = vsel %vm435, %v398, 0
        %439 = vmatpush.bf16.msra.mxu0 0
        %440 = vmatpush.bf16.msra.mxu0 0
        %441 = vmatpush.bf16.msra.mxu0 %v428
        %442 = vmatpush.bf16.msra.mxu0 %v427
        %443 = vmatpush.bf16.msra.mxu0 %v426
        %444 = vmatpush.bf16.msra.mxu0 %v425
        %445 = vmatpush.bf16.msra.mxu0 %v424
        %446 = vmatpush.bf16.msra.mxu0 %v423
        %447 = vmatmul.bf16.gmra.mxu0 %v437
        %v448 = vpop.f32.mrf.mxu0
        %v449 = vadd.f32 %v392, %v448
        %v450 = vpop.f32.mrf.mxu0
        %v451 = vadd.f32 %v392, %v450
        %452 = vdwg.mxu0
        %vm453 = vcmp.ge.f32.partialorder %v449, 0.0
        %vm454 = vcmp.ge.f32.partialorder %v451, 0.0
        %v455 = vmul.f32 %v449, 0.2
        %v456 = vmul.f32 %v451, 0.2
        %v457 = vsel %vm453, %v449, %v455
        %v458 = vsel %vm454, %v451, %v456
        %459 = vst.msk [vmem:[#allocation2 + $0x8] sm:$0xff] %vm332, %v457
        %460 = vst.msk [vmem:[#allocation2 + $0x10] sm:$0xff] %vm332, %v458
        %v461 = vld [vmem:[#allocation2 + $0x7] sm:$0xff]
        %v462 = vld [vmem:[#allocation2 + $0xf] sm:$0xff]
        %v463 = vpack.c.bf16 %v461, %v461
        %v464 = vpack.c.bf16 %v462, %v462
        %vm465 = vcmask 519168
        %466 = vst.msk [vmem:[#allocation3] sm:$0xf] %vm465, %v463
        %467 = vst.msk [vmem:[#allocation3 + $0x8] sm:$0xf] %vm465, %v464
        %v468 = vpack.c.bf16 %v457, %v457
        %v469 = vpack.c.bf16 %v458, %v458
        %472 = vrot.lane.b32.xlu0 %v468, 64
        %v473 = vpop.permute.xlu0 %472
        %474 = vrot.lane.b32.xlu0 %v469, 64
        %v475 = vpop.permute.xlu0 %474
        %vm478 = vcmask 1043968
        %479 = vst.msk [vmem:[#allocation3] sm:$0xf] %vm478, %v473
        %480 = vst.msk [vmem:[#allocation3 + $0x8] sm:$0xf] %vm478, %v475
        %v481 = vld [vmem:[#allocation2 + $0x9] sm:$0xff]
        %v482 = vld [vmem:[#allocation2 + $0x11] sm:$0xff]
        %v483 = vpack.c.bf16 %v481, %v481
        %v484 = vpack.c.bf16 %v482, %v482
        %485 = vst.msk [vmem:[#allocation3 + $0x4] sm:$0xf] %vm465, %v483
        %486 = vst.msk [vmem:[#allocation3 + $0xc] sm:$0xf] %vm465, %v484
        %v487 = vld [vmem:[#allocation3] sm:$0xff]
        %v488 = vld [vmem:[#allocation3 + $0x8] sm:$0xff]
        %v489 = vld [vmem:[%s3] sm:$0xf]
        %v490 = vld [vmem:[%s3 + $0x4] sm:$0xf]
        %v491 = vld [vmem:[%s3 + $0x8] sm:$0xf]
        %v492 = vld [vmem:[%s3 + $0xc] sm:$0xf]
        %v493 = vld [vmem:[%s3 + $0x10] sm:$0xf]
        %v494 = vld [vmem:[%s3 + $0x14] sm:$0xf]
        %v495 = vld [vmem:[%s3 + $0x18] sm:$0xf]
        %v496 = vld [vmem:[%s3 + $0x1c] sm:$0xf]
        %v497 = vld [vmem:[%s3 + $0x20] sm:$0xf]
        %v498 = vld [vmem:[%s3 + $0x24] sm:$0xf]
        %v499 = vld [vmem:[%s3 + $0x28] sm:$0xf]
        %v500 = vld [vmem:[%s3 + $0x2c] sm:$0xf]
        %v501 = vld [vmem:[%s3 + $0x30] sm:$0xf]
        %v502 = vld [vmem:[%s3 + $0x34] sm:$0xf]
        %v503 = vld [vmem:[%s3 + $0x38] sm:$0xf]
        %v504 = vld [vmem:[%s3 + $0x3c] sm:$0xf]
        %v505 = vld [vmem:[%s3 + $0x40] sm:$0xf]
        %v506 = vld [vmem:[%s3 + $0x44] sm:$0xf]
        %v507 = vld [vmem:[%s3 + $0x48] sm:$0xf]
        %v508 = vld [vmem:[%s3 + $0x4c] sm:$0xf]
        %v509 = vld [vmem:[%s3 + $0x50] sm:$0xf]
        %v510 = vld [vmem:[%s3 + $0x54] sm:$0xf]
        %v511 = vld [vmem:[%s3 + $0x58] sm:$0xf]
        %v512 = vld [vmem:[%s3 + $0x5c] sm:$0xf]
        %v513 = vld [vmem:[%s4] sm:$0x1]
        %v515 = vperm.slane %v513, 0
        %v519 = vunpack.c.l.b16 %v487
        %v520 = vunpack.c.h.b16 %v487
        %v521 = vunpack.c.l.b16 %v488
        %v522 = vunpack.c.h.b16 %v488
        %v523 = vpack.c.b16 %v521, %v519
        %v524 = vpack.c.b16 %v522, %v520
        %v550 = vunpack.c.l.b16 %v489
        %v551 = vunpack.c.l.b16 %v490
        %v552 = vunpack.c.l.b16 %v491
        %v553 = vunpack.c.l.b16 %v492
        %v554 = vunpack.c.l.b16 %v493
        %v555 = vunpack.c.l.b16 %v494
        %v556 = vunpack.c.l.b16 %v495
        %v557 = vunpack.c.l.b16 %v496
        %v558 = vunpack.c.l.b16 %v497
        %v559 = vunpack.c.l.b16 %v498
        %v560 = vunpack.c.l.b16 %v499
        %v561 = vunpack.c.l.b16 %v500
        %v562 = vunpack.c.l.b16 %v501
        %v563 = vunpack.c.l.b16 %v502
        %v564 = vunpack.c.l.b16 %v503
        %v565 = vunpack.c.l.b16 %v504
        %v566 = vunpack.c.l.b16 %v505
        %v567 = vunpack.c.l.b16 %v506
        %v568 = vunpack.c.l.b16 %v507
        %v569 = vunpack.c.l.b16 %v508
        %v570 = vunpack.c.l.b16 %v509
        %v571 = vunpack.c.l.b16 %v510
        %v572 = vunpack.c.l.b16 %v511
        %v573 = vunpack.c.l.b16 %v512
        %v574 = vpack.c.b16 %v551, %v550
        %v575 = vpack.c.b16 %v553, %v552
        %v576 = vpack.c.b16 %v555, %v554
        %v577 = vpack.c.b16 %v557, %v556
        %v578 = vpack.c.b16 %v559, %v558
        %v579 = vpack.c.b16 %v561, %v560
        %v580 = vpack.c.b16 %v563, %v562
        %v581 = vpack.c.b16 %v565, %v564
        %v582 = vpack.c.b16 %v567, %v566
        %v583 = vpack.c.b16 %v569, %v568
        %v584 = vpack.c.b16 %v571, %v570
        %v585 = vpack.c.b16 %v573, %v572
        %v599 = vsel %vm332, %v524, 0
        %601 = vmatpush.bf16.msra.mxu0 %v581
        %602 = vmatpush.bf16.msra.mxu0 %v580
        %603 = vmatpush.bf16.msra.mxu0 %v579
        %604 = vmatpush.bf16.msra.mxu0 %v578
        %605 = vmatpush.bf16.msra.mxu0 %v577
        %606 = vmatpush.bf16.msra.mxu0 %v576
        %607 = vmatpush.bf16.msra.mxu0 %v575
        %608 = vmatpush.bf16.msra.mxu0 %v574
        %609 = vmatmul.bf16.gmra.mxu0 %v523
        %v610 = vpop.f32.mrf.mxu0
        %v611 = vadd.f32 %v515, %v610
        %v612 = vpop.f32.mrf.mxu0
        %v613 = vadd.f32 %v515, %v612
        %614 = vdwg.mxu0
        %615 = vmatpush.bf16.msra.mxu0 0
        %616 = vmatpush.bf16.msra.mxu0 0
        %617 = vmatpush.bf16.msra.mxu0 0
        %618 = vmatpush.bf16.msra.mxu0 0
        %619 = vmatpush.bf16.msra.mxu0 %v585
        %620 = vmatpush.bf16.msra.mxu0 %v584
        %621 = vmatpush.bf16.msra.mxu0 %v583
        %622 = vmatpush.bf16.msra.mxu0 %v582
        %623 = vmatmul.bf16.gmra.mxu0 %v599
        %v624 = vpop.f32.mrf.mxu0
        %v625 = vadd.f32 %v611, %v624
        %v626 = vpop.f32.mrf.mxu0
        %v627 = vadd.f32 %v613, %v626
        %628 = vdwg.mxu0
        %vm629 = vcmp.ge.f32.partialorder %v625, 0.0
        %vm630 = vcmp.ge.f32.partialorder %v627, 0.0
        %v631 = vmul.f32 %v625, 0.2
        %v632 = vmul.f32 %v627, 0.2
        %v633 = vsel %vm629, %v625, %v631
        %v634 = vsel %vm630, %v627, %v632
        %635 = vst.msk [vmem:[#allocation2 + $0x8] sm:$0xff] %vm332, %v633
        %636 = vst.msk [vmem:[#allocation2 + $0x10] sm:$0xff] %vm332, %v634
        %v637 = vld [vmem:[#allocation2 + $0x6] sm:$0xff]
        %v638 = vld [vmem:[#allocation2 + $0xe] sm:$0xff]
        %v639 = vpack.c.bf16 %v637, %v637
        %v640 = vpack.c.bf16 %v638, %v638
        %641 = vst.msk [vmem:[#allocation3] sm:$0xf] %vm465, %v639
        %642 = vst.msk [vmem:[#allocation3 + $0x8] sm:$0xf] %vm465, %v640
        %v643 = vpack.c.bf16 %v633, %v633
        %v644 = vpack.c.bf16 %v634, %v634
        %647 = vrot.lane.b32.xlu0 %v643, 64
        %v648 = vpop.permute.xlu0 %647
        %649 = vrot.lane.b32.xlu0 %v644, 64
        %v650 = vpop.permute.xlu0 %649
        %653 = vst.msk [vmem:[#allocation3] sm:$0xf] %vm478, %v648
        %654 = vst.msk [vmem:[#allocation3 + $0x8] sm:$0xf] %vm478, %v650
        %v655 = vld [vmem:[#allocation2 + $0xa] sm:$0xff]
        %v656 = vld [vmem:[#allocation2 + $0x12] sm:$0xff]
        %v657 = vpack.c.bf16 %v655, %v655
        %v658 = vpack.c.bf16 %v656, %v656
        %659 = vst.msk [vmem:[#allocation3 + $0x4] sm:$0xf] %vm465, %v657
        %660 = vst.msk [vmem:[#allocation3 + $0xc] sm:$0xf] %vm465, %v658
        %v661 = vld [vmem:[#allocation3] sm:$0xff]
        %v662 = vld [vmem:[#allocation3 + $0x8] sm:$0xff]
        %v663 = vld [vmem:[%s5] sm:$0xf]
        %v664 = vld [vmem:[%s5 + $0x4] sm:$0xf]
        %v665 = vld [vmem:[%s5 + $0x8] sm:$0xf]
        %v666 = vld [vmem:[%s5 + $0xc] sm:$0xf]
        %v667 = vld [vmem:[%s5 + $0x10] sm:$0xf]
        %v668 = vld [vmem:[%s5 + $0x14] sm:$0xf]
        %v669 = vld [vmem:[%s5 + $0x18] sm:$0xf]
        %v670 = vld [vmem:[%s5 + $0x1c] sm:$0xf]
        %v671 = vld [vmem:[%s5 + $0x20] sm:$0xf]
        %v672 = vld [vmem:[%s5 + $0x24] sm:$0xf]
        %v673 = vld [vmem:[%s5 + $0x28] sm:$0xf]
        %v674 = vld [vmem:[%s5 + $0x2c] sm:$0xf]
        %v675 = vld [vmem:[%s5 + $0x30] sm:$0xf]
        %v676 = vld [vmem:[%s5 + $0x34] sm:$0xf]
        %v677 = vld [vmem:[%s5 + $0x38] sm:$0xf]
        %v678 = vld [vmem:[%s5 + $0x3c] sm:$0xf]
        %v679 = vld [vmem:[%s5 + $0x40] sm:$0xf]
        %v680 = vld [vmem:[%s5 + $0x44] sm:$0xf]
        %v681 = vld [vmem:[%s5 + $0x48] sm:$0xf]
        %v682 = vld [vmem:[%s5 + $0x4c] sm:$0xf]
        %v683 = vld [vmem:[%s5 + $0x50] sm:$0xf]
        %v684 = vld [vmem:[%s5 + $0x54] sm:$0xf]
        %v685 = vld [vmem:[%s5 + $0x58] sm:$0xf]
        %v686 = vld [vmem:[%s5 + $0x5c] sm:$0xf]
        %v687 = vld [vmem:[%s6] sm:$0x1]
        %v689 = vperm.slane %v687, 0
        %v693 = vunpack.c.l.b16 %v661
        %v694 = vunpack.c.h.b16 %v661
        %v695 = vunpack.c.l.b16 %v662
        %v696 = vunpack.c.h.b16 %v662
        %v697 = vpack.c.b16 %v695, %v693
        %v698 = vpack.c.b16 %v696, %v694
        %v724 = vunpack.c.l.b16 %v663
        %v725 = vunpack.c.l.b16 %v664
        %v726 = vunpack.c.l.b16 %v665
        %v727 = vunpack.c.l.b16 %v666
        %v728 = vunpack.c.l.b16 %v667
        %v729 = vunpack.c.l.b16 %v668
        %v730 = vunpack.c.l.b16 %v669
        %v731 = vunpack.c.l.b16 %v670
        %v732 = vunpack.c.l.b16 %v671
        %v733 = vunpack.c.l.b16 %v672
        %v734 = vunpack.c.l.b16 %v673
        %v735 = vunpack.c.l.b16 %v674
        %v736 = vunpack.c.l.b16 %v675
        %v737 = vunpack.c.l.b16 %v676
        %v738 = vunpack.c.l.b16 %v677
        %v739 = vunpack.c.l.b16 %v678
        %v740 = vunpack.c.l.b16 %v679
        %v741 = vunpack.c.l.b16 %v680
        %v742 = vunpack.c.l.b16 %v681
        %v743 = vunpack.c.l.b16 %v682
        %v744 = vunpack.c.l.b16 %v683
        %v745 = vunpack.c.l.b16 %v684
        %v746 = vunpack.c.l.b16 %v685
        %v747 = vunpack.c.l.b16 %v686
        %v748 = vpack.c.b16 %v725, %v724
        %v749 = vpack.c.b16 %v727, %v726
        %v750 = vpack.c.b16 %v729, %v728
        %v751 = vpack.c.b16 %v731, %v730
        %v752 = vpack.c.b16 %v733, %v732
        %v753 = vpack.c.b16 %v735, %v734
        %v754 = vpack.c.b16 %v737, %v736
        %v755 = vpack.c.b16 %v739, %v738
        %v756 = vpack.c.b16 %v741, %v740
        %v757 = vpack.c.b16 %v743, %v742
        %v758 = vpack.c.b16 %v745, %v744
        %v759 = vpack.c.b16 %v747, %v746
        %v773 = vsel %vm332, %v698, 0
        %775 = vmatpush.bf16.msra.mxu0 %v755
        %776 = vmatpush.bf16.msra.mxu0 %v754
        %777 = vmatpush.bf16.msra.mxu0 %v753
        %778 = vmatpush.bf16.msra.mxu0 %v752
        %779 = vmatpush.bf16.msra.mxu0 %v751
        %780 = vmatpush.bf16.msra.mxu0 %v750
        %781 = vmatpush.bf16.msra.mxu0 %v749
        %782 = vmatpush.bf16.msra.mxu0 %v748
        %783 = vmatmul.bf16.gmra.mxu0 %v697
        %v784 = vpop.f32.mrf.mxu0
        %v785 = vadd.f32 %v689, %v784
        %v786 = vpop.f32.mrf.mxu0
        %v787 = vadd.f32 %v689, %v786
        %788 = vdwg.mxu0
        %789 = vmatpush.bf16.msra.mxu0 0
        %790 = vmatpush.bf16.msra.mxu0 0
        %791 = vmatpush.bf16.msra.mxu0 0
        %792 = vmatpush.bf16.msra.mxu0 0
        %793 = vmatpush.bf16.msra.mxu0 %v759
        %794 = vmatpush.bf16.msra.mxu0 %v758
        %795 = vmatpush.bf16.msra.mxu0 %v757
        %796 = vmatpush.bf16.msra.mxu0 %v756
        %797 = vmatmul.bf16.gmra.mxu0 %v773
        %v798 = vpop.f32.mrf.mxu0
        %v799 = vadd.f32 %v785, %v798
        %v800 = vpop.f32.mrf.mxu0
        %v801 = vadd.f32 %v787, %v800
        %802 = vdwg.mxu0
        %vm803 = vcmp.ge.f32.partialorder %v799, 0.0
        %vm804 = vcmp.ge.f32.partialorder %v801, 0.0
        %v805 = vmul.f32 %v799, 0.2
        %v806 = vmul.f32 %v801, 0.2
        %v807 = vsel %vm803, %v799, %v805
        %v808 = vsel %vm804, %v801, %v806
        %809 = vst.msk [vmem:[#allocation2 + $0x8] sm:$0xff] %vm332, %v807
        %810 = vst.msk [vmem:[#allocation2 + $0x10] sm:$0xff] %vm332, %v808
        %v811 = vld [vmem:[#allocation2 + $0x7] sm:$0xff]
        %v812 = vld [vmem:[#allocation2 + $0xf] sm:$0xff]
        %v813 = vpack.c.bf16 %v811, %v811
        %v814 = vpack.c.bf16 %v812, %v812
        %815 = vst.msk [vmem:[#allocation3] sm:$0xf] %vm465, %v813
        %816 = vst.msk [vmem:[#allocation3 + $0x8] sm:$0xf] %vm465, %v814
        %v817 = vpack.c.bf16 %v807, %v807
        %v818 = vpack.c.bf16 %v808, %v808
        %821 = vrot.lane.b32.xlu0 %v817, 64
        %v822 = vpop.permute.xlu0 %821
        %823 = vrot.lane.b32.xlu0 %v818, 64
        %v824 = vpop.permute.xlu0 %823
        %827 = vst.msk [vmem:[#allocation3] sm:$0xf] %vm478, %v822
        %828 = vst.msk [vmem:[#allocation3 + $0x8] sm:$0xf] %vm478, %v824
        %v829 = vld [vmem:[#allocation2 + $0x9] sm:$0xff]
        %v830 = vld [vmem:[#allocation2 + $0x11] sm:$0xff]
        %v831 = vpack.c.bf16 %v829, %v829
        %v832 = vpack.c.bf16 %v830, %v830
        %833 = vst.msk [vmem:[#allocation3 + $0x4] sm:$0xf] %vm465, %v831
        %834 = vst.msk [vmem:[#allocation3 + $0xc] sm:$0xf] %vm465, %v832
        %v835 = vld [vmem:[#allocation3] sm:$0xff]
        %v836 = vld [vmem:[#allocation3 + $0x8] sm:$0xff]
        %v837 = vld [vmem:[%s7] sm:$0xf]
        %v838 = vld [vmem:[%s7 + $0x4] sm:$0xf]
        %v839 = vld [vmem:[%s7 + $0x8] sm:$0xf]
        %v840 = vld [vmem:[%s7 + $0xc] sm:$0xf]
        %v841 = vld [vmem:[%s7 + $0x10] sm:$0xf]
        %v842 = vld [vmem:[%s7 + $0x14] sm:$0xf]
        %v843 = vld [vmem:[%s7 + $0x18] sm:$0xf]
        %v844 = vld [vmem:[%s7 + $0x1c] sm:$0xf]
        %v845 = vld [vmem:[%s7 + $0x20] sm:$0xf]
        %v846 = vld [vmem:[%s7 + $0x24] sm:$0xf]
        %v847 = vld [vmem:[%s7 + $0x28] sm:$0xf]
        %v848 = vld [vmem:[%s7 + $0x2c] sm:$0xf]
        %v849 = vld [vmem:[%s7 + $0x30] sm:$0xf]
        %v850 = vld [vmem:[%s7 + $0x34] sm:$0xf]
        %v851 = vld [vmem:[%s7 + $0x38] sm:$0xf]
        %v852 = vld [vmem:[%s7 + $0x3c] sm:$0xf]
        %v853 = vld [vmem:[%s7 + $0x40] sm:$0xf]
        %v854 = vld [vmem:[%s7 + $0x44] sm:$0xf]
        %v855 = vld [vmem:[%s7 + $0x48] sm:$0xf]
        %v856 = vld [vmem:[%s7 + $0x4c] sm:$0xf]
        %v857 = vld [vmem:[%s7 + $0x50] sm:$0xf]
        %v858 = vld [vmem:[%s7 + $0x54] sm:$0xf]
        %v859 = vld [vmem:[%s7 + $0x58] sm:$0xf]
        %v860 = vld [vmem:[%s7 + $0x5c] sm:$0xf]
        %v861 = vld [vmem:[%s8] sm:$0x1]
        %v863 = vperm.slane %v861, 0
        %v867 = vunpack.c.l.b16 %v835
        %v868 = vunpack.c.h.b16 %v835
        %v869 = vunpack.c.l.b16 %v836
        %v870 = vunpack.c.h.b16 %v836
        %v871 = vpack.c.b16 %v869, %v867
        %v872 = vpack.c.b16 %v870, %v868
        %v898 = vunpack.c.l.b16 %v837
        %v899 = vunpack.c.l.b16 %v838
        %v900 = vunpack.c.l.b16 %v839
        %v901 = vunpack.c.l.b16 %v840
        %v902 = vunpack.c.l.b16 %v841
        %v903 = vunpack.c.l.b16 %v842
        %v904 = vunpack.c.l.b16 %v843
        %v905 = vunpack.c.l.b16 %v844
        %v906 = vunpack.c.l.b16 %v845
        %v907 = vunpack.c.l.b16 %v846
        %v908 = vunpack.c.l.b16 %v847
        %v909 = vunpack.c.l.b16 %v848
        %v910 = vunpack.c.l.b16 %v849
        %v911 = vunpack.c.l.b16 %v850
        %v912 = vunpack.c.l.b16 %v851
        %v913 = vunpack.c.l.b16 %v852
        %v914 = vunpack.c.l.b16 %v853
        %v915 = vunpack.c.l.b16 %v854
        %v916 = vunpack.c.l.b16 %v855
        %v917 = vunpack.c.l.b16 %v856
        %v918 = vunpack.c.l.b16 %v857
        %v919 = vunpack.c.l.b16 %v858
        %v920 = vunpack.c.l.b16 %v859
        %v921 = vunpack.c.l.b16 %v860
        %v922 = vpack.c.b16 %v899, %v898
        %v923 = vpack.c.b16 %v901, %v900
        %v924 = vpack.c.b16 %v903, %v902
        %v925 = vpack.c.b16 %v905, %v904
        %v926 = vpack.c.b16 %v907, %v906
        %v927 = vpack.c.b16 %v909, %v908
        %v928 = vpack.c.b16 %v911, %v910
        %v929 = vpack.c.b16 %v913, %v912
        %v930 = vpack.c.b16 %v915, %v914
        %v931 = vpack.c.b16 %v917, %v916
        %v932 = vpack.c.b16 %v919, %v918
        %v933 = vpack.c.b16 %v921, %v920
        %v947 = vsel %vm332, %v872, 0
        %949 = vmatpush.bf16.msra.mxu0 %v929
        %950 = vmatpush.bf16.msra.mxu0 %v928
        %951 = vmatpush.bf16.msra.mxu0 %v927
        %952 = vmatpush.bf16.msra.mxu0 %v926
        %953 = vmatpush.bf16.msra.mxu0 %v925
        %954 = vmatpush.bf16.msra.mxu0 %v924
        %955 = vmatpush.bf16.msra.mxu0 %v923
        %956 = vmatpush.bf16.msra.mxu0 %v922
        %957 = vmatmul.bf16.gmra.mxu0 %v871
        %v958 = vpop.f32.mrf.mxu0
        %v959 = vadd.f32 %v863, %v958
        %v960 = vpop.f32.mrf.mxu0
        %v961 = vadd.f32 %v863, %v960
        %962 = vdwg.mxu0
        %963 = vmatpush.bf16.msra.mxu0 0
        %964 = vmatpush.bf16.msra.mxu0 0
        %965 = vmatpush.bf16.msra.mxu0 0
        %966 = vmatpush.bf16.msra.mxu0 0
        %967 = vmatpush.bf16.msra.mxu0 %v933
        %968 = vmatpush.bf16.msra.mxu0 %v932
        %969 = vmatpush.bf16.msra.mxu0 %v931
        %970 = vmatpush.bf16.msra.mxu0 %v930
        %971 = vmatmul.bf16.gmra.mxu0 %v947
        %v972 = vpop.f32.mrf.mxu0
        %v973 = vadd.f32 %v959, %v972
        %v974 = vpop.f32.mrf.mxu0
        %v975 = vadd.f32 %v961, %v974
        %976 = vdwg.mxu0
        %v977 = vpack.c.bf16 %v973, %v973
        %v978 = vpack.c.bf16 %v975, %v975
        %979 = vst [vmem:[%s325] sm:$0xf] %v977
        %980 = vst [vmem:[%s325 + $0x4] sm:$0xf] %v978
        %s981 = sand.u32 %s225, 1
        %s982 = scalar_lea.sflag [#allocation5], %s981
        %s983 = sand.u32 %s225, 1
        %s984 = smul.addr %s983, 8
        %s985 = scalar_lea.vmem [#allocation4], %s984
        // Predicated region
        $region57: #{tpu_custom_call.1} parent=55 // pred_check
          %p986 = pneg %p235
        $region58: #{tpu_custom_call.1} parent=55 // pred_check_branch
          %988 = sbr.rel (%p986) target = $region60
        $region59: #{tpu_custom_call.1} parent=55 // pred_region
          %990 = vsyncadd %s982, 0
          %s991 = smul.addr %s23, 2
          %s992 = smul.addr %s991, 4
          %s993 = scalar_lea.hbm %s9, %s992
          %s994 = sshll.u32 %s985, 4
          %s995 = int_to_ptr.vmem [resolvable:$true] %s994
          %s996 = sshll.u32 %s993, 4
          %s997 = int_to_ptr.hbm [resolvable:$true] %s996
          %1002 = dma.vmem_to_hbm [thread:$0]  %s995, 128, %s997, %s982, 64, 64, 4
        $region60: #{tpu_custom_call.1} parent=55 // pred_fallthru
          _
      $region56: #{tpu_custom_call.1} parent=5 // pred_fallthru
        _
      %p1003 = scmp.le.s32.totalorder 2, %s18
      // Predicated region
      $region61: #{tpu_custom_call.1} parent=5 // pred_check
        %p1004 = pneg %p1003
      $region62: #{tpu_custom_call.1} parent=5 // pred_check_branch
        %1006 = sbr.rel (%p1004) target = $region64
      $region63: #{tpu_custom_call.1} parent=5 // pred_region
        %s1007 = ssub.s32 %s18, 2
        // Predicated region
        $region65: #{tpu_custom_call.1} parent=63 // pred_check
          %p1008 = pneg %p241
        $region66: #{tpu_custom_call.1} parent=63 // pred_check_branch
          %1010 = sbr.rel (%p1008) target = $region68
        $region67: #{tpu_custom_call.1} parent=63 // pred_region
          %s1011 = sand.u32 %s226, 1
          %s1012 = scalar_lea.sflag [#allocation5], %s1011
          %s1013 = sand.u32 %s226, 1
          %s1014 = smul.addr %s1013, 8
          %s1015 = scalar_lea.vmem [#allocation4], %s1014
          %1017 = dma.done %s1012, 128
        $region68: #{tpu_custom_call.1} parent=63 // pred_fallthru
          _
      $region64: #{tpu_custom_call.1} parent=5 // pred_fallthru
        _
    $region6: #{tpu_custom_call.1} parent=1 // loop_footer
      %s22 = sadd.s32 1, %s18
    $region7: #{tpu_custom_call.1} parent=1 // loop_footer_branch
      %17 = sbr.rel target = $region3
    $region8: #{tpu_custom_call.1} parent=1 // loop_exit
      _
    %1018 = vsyncpa [#allocation5], 1
    %s1019 = scalar_lea.sflag [#allocation5], 1
    %1020 = vsyncpa %s1019, 1

</llo_original>
